<compile_context>
chip_gen: v6e
topology: v6e:2x2x1
jax: 0.10.0
libtpu: 0.0.40
codegen_flags: <defaults>
</compile_context>

<pallas_src>
import jax
import jax.numpy as jnp
from jax.experimental import pallas as pl
from jax.experimental.pallas import tpu as pltpu


def _simple_example_kernel(x_ref, o_ref):
    x = x_ref[...]
    one_plus_x = 1.0 + x
    denom = one_plus_x * one_plus_x * one_plus_x
    # Exact division: compute is fully hidden under DMA, so no approx needed.
    o_ref[...] = x / denom


# ~1M elements (~4 MiB f32) per grid step: per-step overhead becomes noise,
# while in+out double-buffering (~4x block bytes ~= 16 MiB) still fits under
# the 32 MiB scoped-VMEM limit we request explicitly (safe on v5e/v6e/v7x).
_TARGET_BLOCK_ELEMS = 1 << 20
_VMEM_LIMIT_BYTES = 32 * 1024 * 1024
# Candidate slab widths, widest first: a wide last dim gives unmasked,
# full-width vector stores (lane-dense out_spec).
_WIDTHS = (4096, 2048, 1024, 512, 256, 128)
# Below this size the pallas_call launch + reshape overhead dominates the
# ~KBs of traffic, so plain fused XLA is faster. Kept small here so the demo
# in __main__ (2048 elements) still exercises the kernel path.
_MIN_PALLAS_ELEMS = 1024


def simple_example_forward(x):
    """Computes y = x / (1 + x)**3 elementwise with a Pallas TPU kernel.

    Accepts any shape; result has the same shape/dtype as the input.
    """
    orig_shape = x.shape
    n = x.size

    if n < _MIN_PALLAS_ELEMS:
        # Tiny inputs: skip the kernel launch entirely.
        return x / (1.0 + x) ** 3

    flat = x.reshape(-1)

    # Pick the widest slab width that divides n exactly -> no pad and no
    # post-slice HBM round-trips for common shapes. Ragged sizes fall back to
    # width=1024 with a minimal pad.
    width = None
    for w in _WIDTHS:
        if n % w == 0:
            width = w
            break
    if width is None:
        width = 1024

    rows = pl.cdiv(n, width)
    padded_n = rows * width
    if padded_n != n:
        flat = jnp.pad(flat, (0, padded_n - n))
    slab = flat.reshape(rows, width)

    # Rows per block: ~_TARGET_BLOCK_ELEMS elements, multiple of 8 (sublane).
    tile_rows = max(8, (_TARGET_BLOCK_ELEMS // width) // 8 * 8)
    if tile_rows >= rows:
        # Single block covering the full array (any row count is legal when
        # the block dim equals the full array dim).
        tile_rows = rows
        grid = (1,)
    else:
        # Ceil-div grid: no tail rows dropped; the partial last block is
        # handled by Pallas boundary masking (elementwise op -> safe).
        grid = (pl.cdiv(rows, tile_rows),)

    out_slab = pl.pallas_call(
        _simple_example_kernel,
        out_shape=jax.ShapeDtypeStruct((rows, width), slab.dtype),
        grid_spec=pltpu.PrefetchScalarGridSpec(
            num_scalar_prefetch=0,
            grid=grid,
            in_specs=[pl.BlockSpec((tile_rows, width), lambda i: (i, 0))],
            out_specs=pl.BlockSpec((tile_rows, width), lambda i: (i, 0)),
        ),
        compiler_params=pltpu.CompilerParams(
            dimension_semantics=("parallel",),   # lets v7x shard the grid over 2 TCs
            vmem_limit_bytes=_VMEM_LIMIT_BYTES,
        ),
    )(slab)

    if padded_n != n:
        out = out_slab.reshape(-1)[:n].reshape(orig_shape)
    else:
        out = out_slab.reshape(orig_shape)
    return out.astype(x.dtype)


if __name__ == "__main__":
    key = jax.random.PRNGKey(0)
    # small NCHW-style input consistent with a typical module test shape
    x = jax.random.normal(key, (2, 4, 16, 16), dtype=jnp.float32)

    y = simple_example_forward(x)
    jax.block_until_ready(y)

    # correctness check against plain-JAX reference
    y_ref = x / (1.0 + x) ** 3
    assert y.shape == x.shape and y.dtype == x.dtype
    assert jnp.allclose(y, y_ref, rtol=1e-5, atol=1e-5), "mismatch vs reference"

    print("KERNEL_OK")
</pallas_src>

<mosaic_0001>
module attributes {stable_mosaic.version = 11 : i64} {
  func.func @_simple_example_kernel(%arg0: i32, %arg1: memref<1x2048xf32, #tpu.memory_space<vmem>>, %arg2: memref<1x2048xf32, #tpu.memory_space<vmem>>) attributes {dimension_semantics = [#tpu.dimension_semantics<parallel>], iteration_bounds = array<i64: 1>, scalar_prefetch = 0 : i64, scratch_operands = 0 : i64, tpu.core_type = #tpu.core_type<tc>, window_params = [{transform_indices = @transform_0, window_bounds = array<i64: 1, 2048>}, {transform_indices = @transform_1, window_bounds = array<i64: 1, 2048>}]} {
    %c0 = arith.constant 0 : index
    %c0_0 = arith.constant 0 : index
    %0 = vector.load %arg1[%c0, %c0_0] : memref<1x2048xf32, #tpu.memory_space<vmem>>, vector<1x2048xf32>
    %cst = arith.constant 1.000000e+00 : f32
    %1 = vector.broadcast %cst : f32 to vector<1x2048xf32>
    %2 = arith.addf %1, %0 : vector<1x2048xf32>
    %3 = arith.mulf %2, %2 : vector<1x2048xf32>
    %4 = arith.mulf %3, %2 : vector<1x2048xf32>
    %5 = arith.divf %0, %4 : vector<1x2048xf32>
    %c0_1 = arith.constant 0 : index
    %c0_2 = arith.constant 0 : index
    %6 = vector.load %arg2[%c0_1, %c0_2] : memref<1x2048xf32, #tpu.memory_space<vmem>>, vector<1x2048xf32>
    tpu.vector_store %arg2[%c0_1, %c0_2], %5 {strides = array<i32>} : memref<1x2048xf32, #tpu.memory_space<vmem>>, vector<1x2048xf32>,
    return
  }
  func.func @transform_0(%arg0: i32) -> (i32, i32) {
    %c0_i32 = arith.constant 0 : i32
    %c0_i32_0 = arith.constant 0 : i32
    return %arg0, %c0_i32 : i32, i32
  }
  func.func @transform_1(%arg0: i32) -> (i32, i32) {
    %c0_i32 = arith.constant 0 : i32
    %c0_i32_0 = arith.constant 0 : i32
    return %arg0, %c0_i32 : i32, i32
  }
}

</mosaic_0001>

<llo_original>
// kernel: tpu_custom_call.1
$region0: #{tpu_custom_call.1}
  #allocation0 [shape = 'u32[]', space=smem, size = 0x4, offset = 0x4, fixed_abs, tag = 'smem constant byte address 0x4 - core index']
  #allocation1 [shape = 'u32[144,128]{1,0:T(1,128)}', space=vmem, size = 0x12000, scoped, tag = 'internal scratch']
  %s0 = inlined_call_operand.hbm [shape: f32[1,2048], index: 0, kind: input, shape index: {}]
  %s1 = inlined_call_operand.hbm [shape: f32[1,2048], index: 1, kind: output, shape index: {}]
  %s2 = sld [smem:[#allocation0]]
  $region18: #{tpu_custom_call.1} parent=0
    _
  %s4 = ssub.s32 1, %s2
  %s5 = scalar_select 0, %s4, %s2
  $region1: #{tpu_custom_call.1} parent=0
    #allocation2 [shape = 'u8[8192]{0}', space=vmem, size = 0x2000, scoped, tag = 'input window, operand 0, single buffered']
    #allocation3 [shape = 's32[1]{0}', space=sflag, size = 0x4, scoped, tag = 'scoped memory for tpu_custom_call.1']
    #allocation4 [shape = 's32[1]{0}', space=sflag, size = 0x4, scoped, tag = 'scoped memory for tpu_custom_call.1']
    #allocation5 [shape = 'u8[8192]{0}', space=vmem, size = 0x2000, scoped, tag = 'output window, operand 0, single buffered']
    %6 = vsyncpa [#allocation3], 0
    %7 = vsyncpa [#allocation4], 0
    // Predicated region
    $region2: #{tpu_custom_call.1} parent=1 // pred_check
      _
    $region3: #{tpu_custom_call.1} parent=1 // pred_check_branch
      %9 = sbr.rel (0) target = $region5
    $region4: #{tpu_custom_call.1} parent=1 // pred_region
      %s11 = ssub.s32 256, 256
      %12 = vsyncadd [#allocation3], %s11
      %s14 = sshll.u32 [#allocation2], 4
      %s15 = int_to_ptr.vmem [resolvable:$true] %s14
      %17 = dma.hbm_to_vmem [thread:$0]  %s0, 256, %s15, [#allocation3]
    $region5: #{tpu_custom_call.1} parent=1 // pred_fallthru
      _
    // Predicated region
    $region6: #{tpu_custom_call.1} parent=1 // pred_check
      _
    $region7: #{tpu_custom_call.1} parent=1 // pred_check_branch
      %19 = sbr.rel (0) target = $region9
    $region8: #{tpu_custom_call.1} parent=1 // pred_region
      %20 = dma.done [#allocation3], 256
    $region9: #{tpu_custom_call.1} parent=1 // pred_fallthru
      _
    %v21 = vld [vmem:[#allocation2] sm:$0xff]
    %v22 = vld [vmem:[#allocation2 + $0x8] sm:$0xff]
    %v23 = vadd.f32 %v21, 1.0
    %v24 = vadd.f32 %v22, 1.0
    %v25 = vmul.f32 %v23, %v23
    %v26 = vmul.f32 %v24, %v24
    %v27 = vmul.f32 %v25, %v23
    %v28 = vmul.f32 %v26, %v24
    %v29 = vrcp.pop %v27
    %v30 = vmul.f32 %v21, %v29
    %v31 = vrcp.pop %v28
    %v32 = vmul.f32 %v22, %v31
    %33 = vst [vmem:[#allocation5] sm:$0xff] %v30
    %34 = vst [vmem:[#allocation5 + $0x8] sm:$0xff] %v32
    // Predicated region
    $region10: #{tpu_custom_call.1} parent=1 // pred_check
      _
    $region11: #{tpu_custom_call.1} parent=1 // pred_check_branch
      %36 = sbr.rel (0) target = $region13
    $region12: #{tpu_custom_call.1} parent=1 // pred_region
      %s38 = ssub.s32 256, 256
      %39 = vsyncadd [#allocation4], %s38
      %s41 = sshll.u32 [#allocation5], 4
      %s42 = int_to_ptr.vmem [resolvable:$true] %s41
      %44 = dma.vmem_to_hbm [thread:$0]  %s42, 256, %s1, [#allocation4]
    $region13: #{tpu_custom_call.1} parent=1 // pred_fallthru
      _
    // Predicated region
    $region14: #{tpu_custom_call.1} parent=1 // pred_check
      _
    $region15: #{tpu_custom_call.1} parent=1 // pred_check_branch
      %46 = sbr.rel (0) target = $region17
    $region16: #{tpu_custom_call.1} parent=1 // pred_region
      %47 = dma.done [#allocation4], 256
    $region17: #{tpu_custom_call.1} parent=1 // pred_fallthru
      _
    %48 = vsyncpa [#allocation3], 1
    %49 = vsyncpa [#allocation4], 1

</llo_original>
